<compile_context>
chip_gen: v5e
topology: v5e:2x2
jax: 0.10.0
libtpu: 0.0.40
codegen_flags: <defaults>
</compile_context>

<pallas_src>
import functools

import jax
import jax.numpy as jnp
from jax.experimental import pallas as pl
from jax.experimental.pallas import tpu as pltpu

LANES = 128          # vreg lane width
MAX_TILE_ROWS = 512  # ~256 KiB f32 per input tile per buffer (measured sweet spot)


def _round_up(x, m):
    return ((x + m - 1) // m) * m


# ---------------- Pallas kernels ----------------
def _losses(d_ref, t_ref, margin):
    """Elementwise contrastive loss, cast to f32 inside the kernel."""
    d = d_ref[...].astype(jnp.float32)
    t = t_ref[...].astype(jnp.float32)
    return t * d + (1.0 - t) * jnp.maximum(margin - d, 0.0)


def _reduce_kernel(reduction, tile_rows, valid_rows_last, inv_n,
                   margin_ref, d_ref, t_ref, o_ref, acc_ref):
    i = pl.program_id(0)
    last = pl.num_programs(0) - 1
    margin = margin_ref[0]                       # SMEM scalar

    @pl.when(i == 0)
    def _():
        acc_ref[...] = jnp.zeros_like(acc_ref)

    losses = _losses(d_ref, t_ref, margin)

    if valid_rows_last == tile_rows:
        # Exact tiling: no partial block anywhere -> unmasked accumulate.
        acc_ref[...] += losses
    else:
        # Only the final (partial) tile pays for masking of its garbage rows.
        @pl.when(i < last)
        def _():
            acc_ref[...] += losses

        @pl.when(i == last)
        def _():
            row = jax.lax.broadcasted_iota(jnp.int32, losses.shape, 0)
            acc_ref[...] += jnp.where(row < valid_rows_last, losses, 0.0)

    @pl.when(i == last)
    def _():
        total = jnp.sum(acc_ref[...])            # single XLU reduce per kernel
        if reduction == "mean":                  # static Python branch
            total = total * inv_n
        o_ref[0] = total                         # scalar straight to SMEM


def _elementwise_kernel(margin_ref, d_ref, t_ref, o_ref):
    # No masking: padded / out-of-bounds elements are discarded by the caller
    # (lane tail) or dropped by Pallas' masked partial-block store (row tail).
    o_ref[...] = _losses(d_ref, t_ref, margin_ref[0])


# ---------------- JAX wrapper ----------------
def _smem_spec():
    return pl.BlockSpec(memory_space=pltpu.MemorySpace.SMEM)


@functools.partial(jax.jit, static_argnames=("reduction",))
def contrastive_loss(distances, target, margin=10.0, reduction="mean"):
    out_shape = distances.shape
    n = distances.size
    d = distances.reshape(-1)                    # native dtype; cast in-kernel
    t = target.reshape(-1)

    rows = pl.cdiv(n, LANES)
    pad = rows * LANES - n
    if pad:
        # Pad target with 1 so padded losses are exactly 0 (1*0 + 0*relu = 0);
        # no in-kernel lane masking needed.  Only the <128-element tail is padded.
        d = jnp.pad(d, (0, pad))
        t = jnp.pad(t, (0, pad), constant_values=1)
    d2 = d.reshape(rows, LANES)
    t2 = t.reshape(rows, LANES)

    if rows <= MAX_TILE_ROWS:
        tile_rows = rows                         # block == full array dim (always legal)
    else:
        tile_rows = MAX_TILE_ROWS                # multiple of 8
    grid = (pl.cdiv(rows, tile_rows),)
    valid_rows_last = rows - (grid[0] - 1) * tile_rows

    margin_arr = jnp.asarray(margin, jnp.float32).reshape(1)
    tile_spec = pl.BlockSpec((tile_rows, LANES), lambda i: (i, 0))

    if reduction in ("mean", "sum"):
        kern = functools.partial(_reduce_kernel, reduction, tile_rows,
                                 valid_rows_last, float(1.0 / n))
        out = pl.pallas_call(
            kern,
            grid=grid,
            out_shape=jax.ShapeDtypeStruct((1,), jnp.float32),
            in_specs=[_smem_spec(), tile_spec, tile_spec],
            out_specs=_smem_spec(),
            scratch_shapes=[pltpu.VMEM((tile_rows, LANES), jnp.float32)],
            compiler_params=pltpu.CompilerParams(
                dimension_semantics=("arbitrary",)),
        )(margin_arr, d2, t2)
        return out[0]

    # reduction == 'none': elementwise losses with the input's shape
    out = pl.pallas_call(
        _elementwise_kernel,
        grid=grid,
        out_shape=jax.ShapeDtypeStruct((rows, LANES), jnp.float32),
        in_specs=[_smem_spec(), tile_spec, tile_spec],
        out_specs=tile_spec,
        compiler_params=pltpu.CompilerParams(
            dimension_semantics=("parallel",)),
    )(margin_arr, d2, t2)
    if pad:
        return out.reshape(-1)[:n].reshape(out_shape)
    return out.reshape(out_shape)


# ---------------- reference (plain jnp) ----------------
def _reference(distances, target, margin=10.0, reduction="mean"):
    d = distances.astype(jnp.float32)
    t = target.astype(jnp.float32)
    losses = t * d + (1.0 - t) * jnp.maximum(margin - d, 0.0)
    if reduction == "mean":
        return jnp.mean(losses)
    if reduction == "sum":
        return jnp.sum(losses)
    return losses


if __name__ == "__main__":
    key = jax.random.PRNGKey(0)
    kd, kt = jax.random.split(key)

    # distances as produced by a siamese pairwise metric with batch=2 -> (B*B,)
    B = 2
    N = B * B
    MARGIN = 10.0
    distances = 2.0 * MARGIN * jax.random.uniform(kd, (N,), jnp.float32)
    target = (jax.random.uniform(kt, (N,)) > 0.5).astype(jnp.int32)

    for red in ("mean", "sum", "none"):
        got = contrastive_loss(distances, target, MARGIN, red)
        jax.block_until_ready(got)
        want = _reference(distances, target, MARGIN, red)
        assert got.shape == want.shape
        assert jnp.allclose(got, want, atol=1e-5, rtol=1e-5), red

    # Exercise the gridded path: >1 grid step, partial last tile, lane-tail pad.
    N2 = 3 * MAX_TILE_ROWS * LANES + 1000        # 197608 elements
    kd2, kt2 = jax.random.split(jax.random.PRNGKey(0), 2)
    d_big = 2.0 * MARGIN * jax.random.uniform(kd2, (N2,), jnp.float32)
    t_big = (jax.random.uniform(kt2, (N2,)) > 0.5).astype(jnp.int32)
    for red in ("mean", "sum"):
        got = contrastive_loss(d_big, t_big, MARGIN, red)
        jax.block_until_ready(got)
        want = _reference(d_big, t_big, MARGIN, red)
        assert jnp.allclose(got, want, atol=1e-2, rtol=1e-4), red
    got = contrastive_loss(d_big, t_big, MARGIN, "none")
    jax.block_until_ready(got)
    assert got.shape == (N2,)
    assert jnp.allclose(got, _reference(d_big, t_big, MARGIN, "none"),
                        atol=1e-5, rtol=1e-5)

    print("KERNEL_OK")
</pallas_src>

<mosaic_0001>
module attributes {stable_mosaic.version = 11 : i64} {
  func.func @_reduce_kernel(%arg0: i32, %arg1: memref<1xf32, #tpu.memory_space<smem>>, %arg2: memref<1x128xf32, #tpu.memory_space<vmem>>, %arg3: memref<1x128xi32, #tpu.memory_space<vmem>>, %arg4: memref<1xf32, #tpu.memory_space<smem>>, %arg5: memref<1x128xf32, #tpu.memory_space<vmem>>) attributes {dimension_semantics = [#tpu.dimension_semantics<arbitrary>], iteration_bounds = array<i64: 1>, scalar_prefetch = 0 : i64, scratch_operands = 1 : i64, tpu.core_type = #tpu.core_type<tc>, window_params = [{transform_indices = @transform_0, window_bounds = array<i64: 1>}, {transform_indices = @transform_1, window_bounds = array<i64: 1, 128>}, {transform_indices = @transform_2, window_bounds = array<i64: 1, 128>}, {transform_indices = @transform_3, window_bounds = array<i64: 1>}]} {
    %c0 = arith.constant 0 : index
    %0 = memref.load %arg1[%c0] : memref<1xf32, #tpu.memory_space<smem>>
    %c0_i32 = arith.constant 0 : i32
    %1 = arith.cmpi eq, %arg0, %c0_i32 : i32
    %2 = arith.extui %1 : i1 to i32
    %c0_i32_0 = arith.constant 0 : i32
    %3 = arith.cmpi ne, %2, %c0_i32_0 : i32
    scf.if %3 {
      %cst_12 = arith.constant 0.000000e+00 : f32
      %22 = vector.broadcast %cst_12 : f32 to vector<1x128xf32>
      %c0_13 = arith.constant 0 : index
      %c0_14 = arith.constant 0 : index
      %23 = vector.load %arg5[%c0_13, %c0_14] : memref<1x128xf32, #tpu.memory_space<vmem>>, vector<1x128xf32>
      tpu.vector_store %arg5[%c0_13, %c0_14], %22 {strides = array<i32>} : memref<1x128xf32, #tpu.memory_space<vmem>>, vector<1x128xf32>,
    } else {
    }
    %c0_1 = arith.constant 0 : index
    %c0_2 = arith.constant 0 : index
    %4 = vector.load %arg2[%c0_1, %c0_2] : memref<1x128xf32, #tpu.memory_space<vmem>>, vector<1x128xf32>
    %c0_3 = arith.constant 0 : index
    %c0_4 = arith.constant 0 : index
    %5 = vector.load %arg3[%c0_3, %c0_4] : memref<1x128xi32, #tpu.memory_space<vmem>>, vector<1x128xi32>
    %6 = arith.sitofp %5 : vector<1x128xi32> to vector<1x128xf32>
    %7 = arith.mulf %6, %4 : vector<1x128xf32>
    %cst = arith.constant 1.000000e+00 : f32
    %8 = vector.broadcast %cst : f32 to vector<1x128xf32>
    %9 = arith.subf %8, %6 : vector<1x128xf32>
    %10 = vector.broadcast %0 : f32 to vector<1x128xf32>
    %11 = arith.subf %10, %4 : vector<1x128xf32>
    %cst_5 = arith.constant 0.000000e+00 : f32
    %12 = vector.broadcast %cst_5 : f32 to vector<1x128xf32>
    %13 = arith.maximumf %11, %12 : vector<1x128xf32>
    %14 = arith.mulf %9, %13 : vector<1x128xf32>
    %15 = arith.addf %7, %14 : vector<1x128xf32>
    %c0_6 = arith.constant 0 : index
    %c0_7 = arith.constant 0 : index
    %16 = vector.load %arg5[%c0_6, %c0_7] : memref<1x128xf32, #tpu.memory_space<vmem>>, vector<1x128xf32>
    %17 = arith.addf %16, %15 : vector<1x128xf32>
    %c0_8 = arith.constant 0 : index
    %c0_9 = arith.constant 0 : index
    %18 = vector.load %arg5[%c0_8, %c0_9] : memref<1x128xf32, #tpu.memory_space<vmem>>, vector<1x128xf32>
    tpu.vector_store %arg5[%c0_8, %c0_9], %17 {strides = array<i32>} : memref<1x128xf32, #tpu.memory_space<vmem>>, vector<1x128xf32>,
    %c0_i32_10 = arith.constant 0 : i32
    %19 = arith.cmpi eq, %arg0, %c0_i32_10 : i32
    %20 = arith.extui %19 : i1 to i32
    %c0_i32_11 = arith.constant 0 : i32
    %21 = arith.cmpi ne, %20, %c0_i32_11 : i32
    scf.if %21 {
      %c0_12 = arith.constant 0 : index
      %c0_13 = arith.constant 0 : index
      %22 = vector.load %arg5[%c0_12, %c0_13] : memref<1x128xf32, #tpu.memory_space<vmem>>, vector<1x128xf32>
      %23 = vector.shape_cast %22 : vector<1x128xf32> to vector<1x1x128xf32>
      %cst_14 = arith.constant dense<0.000000e+00> : vector<1xf32>
      %24 = vector.multi_reduction <add>, %23, %cst_14 [1, 2] : vector<1x1x128xf32> to vector<1xf32>
      %25 = vector.shape_cast %24 : vector<1xf32> to vector<1x1x1xf32>
      %26 = vector.extract %25[0, 0, 0] : f32 from vector<1x1x1xf32>
      %cst_15 = arith.constant 2.500000e-01 : f32
      %27 = arith.mulf %26, %cst_15 : f32
      %c0_16 = arith.constant 0 : index
      %28 = memref.load %arg4[%c0_16] : memref<1xf32, #tpu.memory_space<smem>>
      memref.store %27, %arg4[%c0_16] : memref<1xf32, #tpu.memory_space<smem>>
    } else {
    }
    return
  }
  func.func @transform_0(%arg0: i32) -> i32 {
    %c0_i32 = arith.constant 0 : i32
    %c0_i32_0 = arith.constant 0 : i32
    return %c0_i32 : i32
  }
  func.func @transform_1(%arg0: i32) -> (i32, i32) {
    %c0_i32 = arith.constant 0 : i32
    %c0_i32_0 = arith.constant 0 : i32
    return %arg0, %c0_i32 : i32, i32
  }
  func.func @transform_2(%arg0: i32) -> (i32, i32) {
    %c0_i32 = arith.constant 0 : i32
    %c0_i32_0 = arith.constant 0 : i32
    return %arg0, %c0_i32 : i32, i32
  }
  func.func @transform_3(%arg0: i32) -> i32 {
    %c0_i32 = arith.constant 0 : i32
    %c0_i32_0 = arith.constant 0 : i32
    return %c0_i32 : i32
  }
}

</mosaic_0001>

<llo_original>
// kernel: contrastive_loss.1
$region0: #{contrastive_loss.1}
  #allocation0 [shape = 'u32[]', space=smem, size = 0x4, offset = 0x4, fixed_abs, tag = 'smem constant byte address 0x4 - core index']
  #allocation1 [shape = 'u32[72,128]{1,0:T(1,128)}', space=vmem, size = 0x9000, scoped, tag = 'internal scratch']
  #allocation2 [shape = 'f32[1,128]{1,0:T(1,128)}', space=vmem, size = 0x200, scoped, tag = 'scratch operand']
  #allocation3 [shape = 'f32[1]{0:T(128)S(6)}', space=smem, size = 0x200, scoped, tag = 'scoped memory for contrastive_loss.1']
  %s0 = inlined_call_operand.<no memory space> [shape: f32[1], index: 0, kind: input, shape index: {}]
  %s1 = inlined_call_operand.vmem [shape: f32[1,128], index: 1, kind: input, shape index: {}]
  %s2 = inlined_call_operand.vmem [shape: s32[1,128], index: 2, kind: input, shape index: {}]
  %s3 = inlined_call_operand.hbm [shape: f32[1], index: 3, kind: output, shape index: {}]
  %s4 = sld [smem:[#allocation0]]
  $region30: #{contrastive_loss.1} parent=0
    _
  %s6 = ssub.s32 1, %s4
  %s7 = scalar_select 0, %s6, %s4
  %8 = sst [smem:[#allocation3]] %s0
  $region1: #{contrastive_loss.1} parent=0
    #allocation4 [shape = 'u8[512]{0}', space=smem, size = 0x200, scoped, tag = 'output window, operand 0, single buffered']
    #allocation5 [shape = 's32[1]{0}', space=sflag, size = 0x4, scoped, tag = 'scoped memory for contrastive_loss.1']
    %9 = vsyncpa [#allocation5], 0
    // Predicated region
    $region2: #{contrastive_loss.1} parent=1 // pred_check
      _
    $region3: #{contrastive_loss.1} parent=1 // pred_check_branch
      %11 = sbr.rel (0) target = $region5
    $region4: #{contrastive_loss.1} parent=1 // pred_region
      _
    $region5: #{contrastive_loss.1} parent=1 // pred_fallthru
      _
    // Predicated region
    $region6: #{contrastive_loss.1} parent=1 // pred_check
      _
    $region7: #{contrastive_loss.1} parent=1 // pred_check_branch
      %13 = sbr.rel (0) target = $region9
    $region8: #{contrastive_loss.1} parent=1 // pred_region
      _
    $region9: #{contrastive_loss.1} parent=1 // pred_fallthru
      _
    // Predicated region
    $region10: #{contrastive_loss.1} parent=1 // pred_check
      _
    $region11: #{contrastive_loss.1} parent=1 // pred_check_branch
      %15 = sbr.rel (0) target = $region13
    $region12: #{contrastive_loss.1} parent=1 // pred_region
      _
    $region13: #{contrastive_loss.1} parent=1 // pred_fallthru
      _
    %s16 = sld [smem:[#allocation3]]
    %p17 = scmp.eq.s32.totalorder 0, 0
    // Predicated region
    $region14: #{contrastive_loss.1} parent=1 // pred_check
      %p18 = pneg %p17
    $region15: #{contrastive_loss.1} parent=1 // pred_check_branch
      %20 = sbr.rel (%p18) target = $region17
    $region16: #{contrastive_loss.1} parent=1 // pred_region
      %21 = vst [vmem:[#allocation2] sm:$0x1] 0.0
    $region17: #{contrastive_loss.1} parent=1 // pred_fallthru
      _
    %v22 = vld [vmem:[%s1] sm:$0x1]
    %v23 = vld [vmem:[%s2] sm:$0x1]
    %v24 = vcvt.s32.f32 %v23
    %v25 = vmul.f32 %v24, %v22
    %v26 = vsub.f32 1.0, %v24
    %v27 = vstv %s16
    %v28 = vsub.f32 %v27, %v22
    %v29 = vmax.f32 %v28, 0.0
    %v30 = vmul.f32 %v26, %v29
    %v31 = vadd.f32 %v25, %v30
    %v32 = vld [vmem:[#allocation2] sm:$0x1]
    %v33 = vadd.f32 %v32, %v31
    %34 = vst [vmem:[#allocation2] sm:$0x1] %v33
    // Predicated region
    $region18: #{contrastive_loss.1} parent=1 // pred_check
      %p35 = pneg %p17
    $region19: #{contrastive_loss.1} parent=1 // pred_check_branch
      %37 = sbr.rel (%p35) target = $region21
    $region20: #{contrastive_loss.1} parent=1 // pred_region
      %v38 = vld [vmem:[#allocation2] sm:$0x1]
      %vm39 = vcmask 1040384
      %v40 = vsel %vm39, %v38, 0.0
      %41 = vadd.xlane.f32.xlu0 %v40
      %v42 = vpop.xlane.xlu0 %41
      %v43 = vrot.slane %v42, 4
      %v44 = vadd.f32 %v42, %v43
      %v45 = vrot.slane %v44, 2
      %v46 = vadd.f32 %v44, %v45
      %v47 = vrot.slane %v46, 1
      %v48 = vadd.f32 %v46, %v47
      %s49 = vtos %v48
      %s50 = smul.f32 %s49, 0.25
      %s51 = scalar_lea.smem [#allocation4], 0
      %52 = sst [smem:[%s51]] %s50
    $region21: #{contrastive_loss.1} parent=1 // pred_fallthru
      _
    // Predicated region
    $region22: #{contrastive_loss.1} parent=1 // pred_check
      _
    $region23: #{contrastive_loss.1} parent=1 // pred_check_branch
      %54 = sbr.rel (0) target = $region25
    $region24: #{contrastive_loss.1} parent=1 // pred_region
      %56 = vsyncadd [#allocation5], 0
      %s58 = sshll.u32 %s3, 4
      %s59 = int_to_ptr.hbm [resolvable:$true] %s58
      %61 = dma.smem_to_hbm [#allocation4], 16, %s59, [#allocation5]
    $region25: #{contrastive_loss.1} parent=1 // pred_fallthru
      _
    // Predicated region
    $region26: #{contrastive_loss.1} parent=1 // pred_check
      _
    $region27: #{contrastive_loss.1} parent=1 // pred_check_branch
      %63 = sbr.rel (0) target = $region29
    $region28: #{contrastive_loss.1} parent=1 // pred_region
      %65 = dma.done [#allocation5], 16
    $region29: #{contrastive_loss.1} parent=1 // pred_fallthru
      _
    %66 = sfence
    %67 = vsyncpa [#allocation5], 1

</llo_original>
